<compile_context>
chip_gen: v5e
topology: v5e:2x2
jax: 0.10.0
libtpu: 0.0.40
codegen_flags: <defaults>
</compile_context>

<pallas_src>
import functools

import jax
import jax.numpy as jnp
from jax.experimental import pallas as pl
from jax.experimental.pallas import tpu as pltpu


# ---------------------------------------------------------------------------
# One-time probe: pltpu.roll convention ("verify roll direction once").
# True  -> pltpu.roll(x, 1, axis)[i] == x[i-1]   (jnp.roll convention)
# False -> pltpu.roll(x, 1, axis)[i] == x[i+1]
# ---------------------------------------------------------------------------
def _probe_roll_forward():
    def k(o_ref):
        o_ref[...] = pltpu.roll(
            jax.lax.broadcasted_iota(jnp.int32, (8, 128), 1), shift=1, axis=1)
    try:
        rolled = pl.pallas_call(
            k, out_shape=jax.ShapeDtypeStruct((8, 128), jnp.int32))()
        return int(jax.device_get(rolled)[0, 1]) == 0
    except Exception:
        # Fall back to the documented jnp.roll-equivalent semantics.
        return True


_ROLL_FORWARD = _probe_roll_forward()

# Conservative count of live block-sized f32 temporaries inside one slab of
# the fused diff chain (cast + 2 rolls + abs/sq + 2 weighted products + add).
_TEMP_MULT = 12


def _vmem_capacity_bytes():
    try:
        return int(pltpu.get_tpu_info().vmem_capacity_bytes)
    except Exception:
        return 64 * 1024 * 1024            # v7x per-TC capacity (most restrictive)


def _choose_tiling(nc, hw, itemsize, block_rows):
    """Pick (rows per DMA block, rows per compute slab, #slabs, vmem limit)."""
    cap = _vmem_capacity_bytes()
    # Review guidance: ~64-100 MiB on v5e/v6e (128 MiB physical), <=48 MiB on
    # v7x (64 MiB physical).
    budget = min((cap * 3) // 4, 80 * 1024 * 1024)

    # Inner compute slab: bounds the f32 temporaries Mosaic materializes in
    # VMEM (~512 KiB per temporary), independent of the (large) DMA block.
    slab = (512 * 1024) // max(4 * hw, 1)
    slab = max(8, min(512, (slab // 8) * 8))

    temps = _TEMP_MULT * slab * hw * 4
    wbytes = 2 * 2 * hw * 4                # wx + wy, worst-case double buffered

    if block_rows is not None:
        tb = max(1, min(int(block_rows), nc))
    else:
        avail = budget - temps - wbytes
        tb = max(1, avail // max(2 * hw * itemsize, 1))   # double-buffered input
        tb = min(tb, nc)
        if nc >= 16:
            # Keep >= 2 blocks so the "parallel" axis feeds both v7x TCs and
            # the pipeline overlaps DMA with compute.
            tb = min(tb, -(-nc // 2))
    if tb < nc:
        # TODO(synk): for very large H*W (single 8-row slab exceeding the VMEM
        # budget) a second, lane-tiled grid axis with W-lane edge handling is
        # needed; this path keeps an 8-row block and relies on vmem_limit.
        tb = min(max(8, (tb // 8) * 8), nc)

    # The slab must evenly divide the block.
    slab = min(slab, tb)
    if tb % slab != 0:
        if tb % 8 == 0 and slab > 8:
            while tb % slab:
                slab -= 8
        else:
            slab = tb                      # full-extent block of odd row count
    num_slabs = tb // slab

    est = (2 * tb * hw * itemsize            # double-buffered input block
           + _TEMP_MULT * slab * hw * 4      # slab temporaries
           + wbytes + (2 << 20))             # weights + margin
    vmem_limit = int(min(max(est, 32 * 1024 * 1024),
                         max(cap - (8 << 20), 32 * 1024 * 1024)))
    return tb, slab, num_slabs, vmem_limit


def _grad_partials_kernel(wx_ref, wy_ref, y_ref, out_ref, *, penalty, W, nc,
                          tb, slab, num_slabs, need_row_mask,
                          compute_dx, compute_dy):
    """One grid step: fused weighted partial sum of f(|dx|) and f(|dy|).

    wx_ref / wy_ref : (1, H*W) f32 resident weights (0 or 0.5/n per lane).
    y_ref           : (tb, H*W) block in the source dtype (lane-dense view).
    out_ref         : (1, 1) SMEM scalar, this block's partial contribution.
    """
    wx = wx_ref[...] if compute_dx else None
    wy = wy_ref[...] if compute_dy else None
    base = pl.program_id(0) * tb

    def slab_sum(r0):
        ys = y_ref[pl.ds(r0, slab), :]                    # source dtype slab
        yf = ys.astype(jnp.float32)
        contrib = None
        if compute_dx:
            # Roll in the source dtype (half the XLU vregs for bf16); cast in
            # the diff chain so no standalone f32 copy of the rolled data.
            d = jnp.abs(pltpu.roll(ys, shift=1, axis=1).astype(jnp.float32) - yf)
            if penalty == 'l2':
                d = d * d
            contrib = d * wx
        if compute_dy:
            d = jnp.abs(pltpu.roll(ys, shift=W, axis=1).astype(jnp.float32) - yf)
            if penalty == 'l2':
                d = d * d
            c = d * wy
            contrib = c if contrib is None else contrib + c
        if need_row_mask:
            # Reduce lanes first, then select on the tiny (slab, 1) row vector
            # (select, not multiply: padded rows may hold garbage/NaN).
            row_sums = jnp.sum(contrib, axis=1, keepdims=True)
            rid = base + r0 + jax.lax.broadcasted_iota(jnp.int32, (slab, 1), 0)
            row_sums = jnp.where(rid < nc, row_sums, jnp.float32(0.0))
            return jnp.sum(row_sums)
        return jnp.sum(contrib)

    if num_slabs == 1:
        total = slab_sum(0)
    else:
        total = jax.lax.fori_loop(
            0, num_slabs,
            lambda s, acc: acc + slab_sum(pl.multiple_of(s * slab, slab)),
            jnp.float32(0.0),
            unroll=(num_slabs <= 8))
    out_ref[0, 0] = total


def grad_loss(y_pred, y_true=None, *, penalty='l1', loss_mult=None,
              block_rows=None):
    """Pallas equivalent of Grad(penalty, loss_mult).forward(y_pred, y_true)."""
    del y_true                                   # unused, matches the module
    if penalty not in ('l1', 'l2'):
        raise ValueError(f"unsupported penalty: {penalty!r}")

    N, C, H, W = y_pred.shape
    nc = N * C
    hw = H * W

    compute_dx = W > 1
    compute_dy = H > 1
    n_dx = nc * H * (W - 1)
    n_dy = nc * (H - 1) * W

    if not (compute_dx or compute_dy):
        # torch.mean of an empty tensor is NaN for both terms.
        g = jnp.float32(jnp.nan)
        return g * loss_mult if loss_mult is not None else g

    # Free row-major view: (N, C, H, W) -> (N*C, H*W). Lane-dense; the DMA
    # stays in the source dtype.
    y = y_pred.reshape(nc, hw)

    # Hoisted per-lane weights (grid invariant, resident in VMEM). 0.5 and the
    # mean denominators are folded in so the kernel emits one scalar per block.
    lane = jnp.arange(hw, dtype=jnp.int32)
    if _ROLL_FORWARD:                    # partner lane is i-1 / i-W
        valid_x = (lane % W) != 0
        valid_y = lane >= W
    else:                                # partner lane is i+1 / i+W
        valid_x = (lane % W) != (W - 1)
        valid_y = lane < (hw - W)
    cx = (0.5 / n_dx) if n_dx > 0 else 0.0
    cy = (0.5 / n_dy) if n_dy > 0 else 0.0
    wx = jnp.where(valid_x, jnp.float32(cx), jnp.float32(0.0)).reshape(1, hw)
    wy = jnp.where(valid_y, jnp.float32(cy), jnp.float32(0.0)).reshape(1, hw)

    itemsize = jnp.dtype(y_pred.dtype).itemsize
    tb, slab, num_slabs, vmem_limit = _choose_tiling(nc, hw, itemsize, block_rows)
    num_blocks = (nc + tb - 1) // tb
    need_row_mask = (num_blocks * tb != nc)

    kernel = functools.partial(
        _grad_partials_kernel,
        penalty=penalty, W=W, nc=nc, tb=tb, slab=slab, num_slabs=num_slabs,
        need_row_mask=need_row_mask,
        compute_dx=compute_dx, compute_dy=compute_dy)

    partials = pl.pallas_call(
        kernel,
        out_shape=jax.ShapeDtypeStruct((num_blocks, 1), jnp.float32),
        grid_spec=pltpu.PrefetchScalarGridSpec(
            num_scalar_prefetch=0,
            grid=(num_blocks,),
            in_specs=[
                pl.BlockSpec((1, hw), lambda i: (0, 0)),    # wx (resident)
                pl.BlockSpec((1, hw), lambda i: (0, 0)),    # wy (resident)
                pl.BlockSpec((tb, hw), lambda i: (i, 0)),   # y block
            ],
            out_specs=pl.BlockSpec((1, 1), lambda i: (i, 0),
                                   memory_space=pltpu.SMEM),
        ),
        compiler_params=pltpu.CompilerParams(
            # Every block writes its own partial -> fully independent steps.
            dimension_semantics=("parallel",),
            vmem_limit_bytes=vmem_limit,
        ),
    )(wx, wy, y)

    g = jnp.sum(partials)                        # 0.5 / n already folded in
    if n_dx == 0 or n_dy == 0:
        g = g + jnp.float32(jnp.nan)             # torch.mean of empty -> NaN
    if loss_mult is not None:
        g = g * loss_mult
    return g


def grad_loss_ref(y_pred, penalty='l1', loss_mult=None):
    """Pure-JAX reference (mirrors the PyTorch forward exactly)."""
    yp = y_pred.astype(jnp.float32)
    dy = jnp.abs(yp[:, :, 1:, :] - yp[:, :, :-1, :])
    dx = jnp.abs(yp[:, :, :, 1:] - yp[:, :, :, :-1])
    if penalty == 'l2':
        dy = dy * dy
        dx = dx * dx
    d = jnp.mean(dx) + jnp.mean(dy)
    g = d / 2.0
    if loss_mult is not None:
        g = g * loss_mult
    return g


if __name__ == "__main__":
    key = jax.random.PRNGKey(0)
    k1, k2, k3, k4 = jax.random.split(key, 4)

    ok = True

    def check(name, out, ref, rtol=2e-5, atol=1e-6):
        global ok
        out = jax.block_until_ready(out)
        if not jnp.allclose(out, ref, rtol=rtol, atol=atol):
            ok = False
            print(f"MISMATCH {name}: {out} vs {ref}")

    # Base NCHW shape consistent with the module's forward.
    y_pred = jax.random.normal(k1, (2, 4, 16, 16), dtype=jnp.float32)
    y_true = jax.random.normal(k2, (2, 4, 16, 16), dtype=jnp.float32)  # unused

    for penalty, loss_mult in [('l1', None), ('l2', None), ('l1', 3.0)]:
        check(f"penalty={penalty} mult={loss_mult}",
              grad_loss(y_pred, y_true, penalty=penalty, loss_mult=loss_mult),
              grad_loss_ref(y_pred, penalty=penalty, loss_mult=loss_mult))

    # Ragged case: nc=9 with forced 8-row blocks exercises the padded-row mask
    # and the multi-block "parallel" grid.
    y_pred2 = jax.random.normal(k3, (3, 3, 16, 16), dtype=jnp.float32)
    check("ragged",
          grad_loss(y_pred2, None, penalty='l2', loss_mult=2.0, block_rows=8),
          grad_loss_ref(y_pred2, penalty='l2', loss_mult=2.0))

    # bf16 input: rolls stay bf16 through the XLU, cast to f32 in the diffs.
    y_bf16 = y_pred.astype(jnp.bfloat16)
    check("bf16", grad_loss(y_bf16, None, penalty='l1'),
          grad_loss_ref(y_bf16, penalty='l1'))

    # Degenerate spatial extents (previously needed 0.5 corrections): H == 2
    # and W == 2, with native 128-multiple lane extents.
    y_h2 = jax.random.normal(k2, (2, 2, 2, 128), dtype=jnp.float32)
    y_w2 = jax.random.normal(k4, (1, 2, 64, 2), dtype=jnp.float32)
    for pen in ('l1', 'l2'):
        check(f"H2-{pen}", grad_loss(y_h2, None, penalty=pen),
              grad_loss_ref(y_h2, penalty=pen))
        check(f"W2-{pen}", grad_loss(y_w2, None, penalty=pen),
              grad_loss_ref(y_w2, penalty=pen))

    # Larger H*W: exercises the inner slab loop (num_slabs > 1) and a
    # multi-block, non-ragged parallel grid.
    y_big = jax.random.normal(k4, (1, 32, 32, 512), dtype=jnp.float32)
    check("slab-loop", grad_loss(y_big, None, penalty='l1', loss_mult=1.5),
          grad_loss_ref(y_big, penalty='l1', loss_mult=1.5),
          rtol=1e-4)

    if ok:
        print("KERNEL_OK")
</pallas_src>

<mosaic_0001>
module attributes {stable_mosaic.version = 11 : i64} {
  func.func @_grad_partials_kernel(%arg0: i32, %arg1: memref<1x256xf32, #tpu.memory_space<vmem>>, %arg2: memref<1x256xf32, #tpu.memory_space<vmem>>, %arg3: memref<8x256xf32, #tpu.memory_space<vmem>>, %arg4: memref<1x1xf32, #tpu.memory_space<smem>>) attributes {dimension_semantics = [#tpu.dimension_semantics<parallel>], iteration_bounds = array<i64: 1>, scalar_prefetch = 0 : i64, scratch_operands = 0 : i64, tpu.core_type = #tpu.core_type<tc>, window_params = [{pipeline_mode = #tpu.pipeline_mode<synchronous>, transform_indices = @transform_0, window_bounds = array<i64: 1, 256>}, {pipeline_mode = #tpu.pipeline_mode<synchronous>, transform_indices = @transform_1, window_bounds = array<i64: 1, 256>}, {transform_indices = @transform_2, window_bounds = array<i64: 8, 256>}, {transform_indices = @transform_3, window_bounds = array<i64: 1, 1>}]} {
    %c0 = arith.constant 0 : index
    %c0_0 = arith.constant 0 : index
    %0 = vector.load %arg1[%c0, %c0_0] : memref<1x256xf32, #tpu.memory_space<vmem>>, vector<1x256xf32>
    %c0_1 = arith.constant 0 : index
    %c0_2 = arith.constant 0 : index
    %1 = vector.load %arg2[%c0_1, %c0_2] : memref<1x256xf32, #tpu.memory_space<vmem>>, vector<1x256xf32>
    %c0_3 = arith.constant 0 : index
    %c0_4 = arith.constant 0 : index
    %2 = vector.load %arg3[%c0_3, %c0_4] : memref<8x256xf32, #tpu.memory_space<vmem>>, vector<8x256xf32>
    %c1_i32 = arith.constant 1 : i32
    %3 = tpu.dynamic_rotate %2 by %c1_i32 dim 1 : vector<8x256xf32>, i32 -> vector<8x256xf32>
    %4 = arith.subf %3, %2 : vector<8x256xf32>
    %5 = math.absf %4 : vector<8x256xf32>
    %6 = vector.broadcast %0 : vector<1x256xf32> to vector<8x256xf32>
    %7 = arith.mulf %5, %6 : vector<8x256xf32>
    %c16_i32 = arith.constant 16 : i32
    %8 = tpu.dynamic_rotate %2 by %c16_i32 dim 1 : vector<8x256xf32>, i32 -> vector<8x256xf32>
    %9 = arith.subf %8, %2 : vector<8x256xf32>
    %10 = math.absf %9 : vector<8x256xf32>
    %11 = vector.broadcast %1 : vector<1x256xf32> to vector<8x256xf32>
    %12 = arith.mulf %10, %11 : vector<8x256xf32>
    %13 = arith.addf %7, %12 : vector<8x256xf32>
    %14 = vector.shape_cast %13 : vector<8x256xf32> to vector<1x8x256xf32>
    %cst = arith.constant dense<0.000000e+00> : vector<1xf32>
    %15 = vector.multi_reduction <add>, %14, %cst [1, 2] : vector<1x8x256xf32> to vector<1xf32>
    %16 = vector.shape_cast %15 : vector<1xf32> to vector<1x1x1xf32>
    %17 = vector.extract %16[0, 0, 0] : f32 from vector<1x1x1xf32>
    %c0_5 = arith.constant 0 : index
    %c0_6 = arith.constant 0 : index
    %18 = memref.load %arg4[%c0_5, %c0_6] : memref<1x1xf32, #tpu.memory_space<smem>>
    memref.store %17, %arg4[%c0_5, %c0_6] : memref<1x1xf32, #tpu.memory_space<smem>>
    return
  }
  func.func @transform_0(%arg0: i32) -> (i32, i32) {
    %c0_i32 = arith.constant 0 : i32
    %c0_i32_0 = arith.constant 0 : i32
    %c0_i32_1 = arith.constant 0 : i32
    return %c0_i32, %c0_i32_0 : i32, i32
  }
  func.func @transform_1(%arg0: i32) -> (i32, i32) {
    %c0_i32 = arith.constant 0 : i32
    %c0_i32_0 = arith.constant 0 : i32
    %c0_i32_1 = arith.constant 0 : i32
    return %c0_i32, %c0_i32_0 : i32, i32
  }
  func.func @transform_2(%arg0: i32) -> (i32, i32) {
    %c0_i32 = arith.constant 0 : i32
    %c0_i32_0 = arith.constant 0 : i32
    return %arg0, %c0_i32 : i32, i32
  }
  func.func @transform_3(%arg0: i32) -> (i32, i32) {
    %c0_i32 = arith.constant 0 : i32
    %c0_i32_0 = arith.constant 0 : i32
    return %arg0, %c0_i32 : i32, i32
  }
}

</mosaic_0001>

<llo_original>
// kernel: tpu_custom_call.1
$region0: #{tpu_custom_call.1}
  #allocation0 [shape = 'u32[]', space=smem, size = 0x4, offset = 0x4, fixed_abs, tag = 'smem constant byte address 0x4 - core index']
  #allocation1 [shape = 'u32[72,128]{1,0:T(1,128)}', space=vmem, size = 0x9000, scoped, tag = 'internal scratch']
  %s0 = inlined_call_operand.hbm [shape: f32[1,256], index: 0, kind: input, shape index: {}]
  %s1 = inlined_call_operand.hbm [shape: f32[1,256], index: 1, kind: input, shape index: {}]
  %s2 = inlined_call_operand.hbm [shape: f32[8,256], index: 2, kind: input, shape index: {}]
  %s3 = inlined_call_operand.hbm [shape: f32[1,1], index: 3, kind: output, shape index: {}]
  %s4 = sld [smem:[#allocation0]]
  $region34: #{tpu_custom_call.1} parent=0
    _
  %s6 = ssub.s32 1, %s4
  %s7 = scalar_select 0, %s6, %s4
  $region1: #{tpu_custom_call.1} parent=0
    #allocation2 [shape = 'u8[1024]{0}', space=vmem, size = 0x400, scoped, tag = 'input window, operand 0, single buffered']
    #allocation3 [shape = 's32[1]{0}', space=sflag, size = 0x4, scoped, tag = 'scoped memory for tpu_custom_call.1']
    #allocation4 [shape = 's32[1]{0}', space=sflag, size = 0x4, scoped, tag = 'scoped memory for tpu_custom_call.1']
    #allocation5 [shape = 'u8[1024]{0}', space=vmem, size = 0x400, scoped, tag = 'input window, operand 1, single buffered']
    #allocation6 [shape = 's32[1]{0}', space=sflag, size = 0x4, scoped, tag = 'scoped memory for tpu_custom_call.1']
    #allocation7 [shape = 'u8[8192]{0}', space=vmem, size = 0x2000, scoped, tag = 'input window, operand 2, single buffered']
    #allocation8 [shape = 'u8[512]{0}', space=smem, size = 0x200, scoped, tag = 'output window, operand 0, single buffered']
    %8 = vsyncpa [#allocation3], 0
    %9 = vsyncpa [#allocation6], 0
    %10 = vsyncpa [#allocation4], 0
    // Predicated region
    $region2: #{tpu_custom_call.1} parent=1 // pred_check
      _
    $region3: #{tpu_custom_call.1} parent=1 // pred_check_branch
      %12 = sbr.rel (0) target = $region5
    $region4: #{tpu_custom_call.1} parent=1 // pred_region
      %14 = vsyncadd [#allocation3], 0
      %s16 = sshll.u32 %s0, 4
      %s17 = int_to_ptr.hbm [resolvable:$true] %s16
      %s18 = sshll.u32 [#allocation2], 4
      %s19 = int_to_ptr.vmem [resolvable:$true] %s18
      %21 = dma.hbm_to_vmem [thread:$0]  %s17, 32, %s19, [#allocation3]
    $region5: #{tpu_custom_call.1} parent=1 // pred_fallthru
      _
    // Predicated region
    $region6: #{tpu_custom_call.1} parent=1 // pred_check
      _
    $region7: #{tpu_custom_call.1} parent=1 // pred_check_branch
      %23 = sbr.rel (0) target = $region9
    $region8: #{tpu_custom_call.1} parent=1 // pred_region
      %25 = vsyncadd [#allocation6], 0
      %s27 = sshll.u32 %s1, 4
      %s28 = int_to_ptr.hbm [resolvable:$true] %s27
      %s29 = sshll.u32 [#allocation5], 4
      %s30 = int_to_ptr.vmem [resolvable:$true] %s29
      %32 = dma.hbm_to_vmem [thread:$0]  %s28, 32, %s30, [#allocation6]
    $region9: #{tpu_custom_call.1} parent=1 // pred_fallthru
      _
    // Predicated region
    $region10: #{tpu_custom_call.1} parent=1 // pred_check
      _
    $region11: #{tpu_custom_call.1} parent=1 // pred_check_branch
      %34 = sbr.rel (0) target = $region13
    $region12: #{tpu_custom_call.1} parent=1 // pred_region
      %36 = vsyncadd [#allocation6], 0
      %s38 = sshll.u32 %s2, 4
      %s39 = int_to_ptr.hbm [resolvable:$true] %s38
      %s40 = sshll.u32 [#allocation7], 4
      %s41 = int_to_ptr.vmem [resolvable:$true] %s40
      %43 = dma.hbm_to_vmem [thread:$0]  %s39, 256, %s41, [#allocation6]
    $region13: #{tpu_custom_call.1} parent=1 // pred_fallthru
      _
    // Predicated region
    $region14: #{tpu_custom_call.1} parent=1 // pred_check
      _
    $region15: #{tpu_custom_call.1} parent=1 // pred_check_branch
      %45 = sbr.rel (0) target = $region17
    $region16: #{tpu_custom_call.1} parent=1 // pred_region
      %47 = dma.done [#allocation3], 32
    $region17: #{tpu_custom_call.1} parent=1 // pred_fallthru
      _
    // Predicated region
    $region18: #{tpu_custom_call.1} parent=1 // pred_check
      _
    $region19: #{tpu_custom_call.1} parent=1 // pred_check_branch
      %49 = sbr.rel (0) target = $region21
    $region20: #{tpu_custom_call.1} parent=1 // pred_region
      %51 = dma.done [#allocation6], 32
    $region21: #{tpu_custom_call.1} parent=1 // pred_fallthru
      _
    // Predicated region
    $region22: #{tpu_custom_call.1} parent=1 // pred_check
      _
    $region23: #{tpu_custom_call.1} parent=1 // pred_check_branch
      %53 = sbr.rel (0) target = $region25
    $region24: #{tpu_custom_call.1} parent=1 // pred_region
      %55 = dma.done [#allocation6], 256
    $region25: #{tpu_custom_call.1} parent=1 // pred_fallthru
      _
    %v56 = vld [vmem:[#allocation2] sm:$0x3]
    %v57 = vld [vmem:[#allocation5] sm:$0x3]
    %v58 = vld [vmem:[#allocation7] sm:$0xff]
    %v59 = vld [vmem:[#allocation7 + $0x8] sm:$0xff]
    %60 = vrot.lane.b32.xlu0 %v58, 1
    %v61 = vpop.permute.xlu0 %60
    %62 = vrot.lane.b32.xlu0 %v59, 1
    %v63 = vpop.permute.xlu0 %62
    %v64 = vlaneseq
    %v65 = vand.u32 %v64, 127
    %vm66 = vcmp.lt.s32.totalorder %v65, 1
    %v67 = vsel %vm66, %v61, %v63
    %v68 = vsel %vm66, %v63, %v61
    %v69 = vsub.f32 %v68, %v58
    %v70 = vsub.f32 %v67, %v59
    %v71 = vand.u32 2147483647, %v69
    %v72 = vand.u32 2147483647, %v70
    %v74 = vperm.slane %v56, 0
    %v75 = vperm.slane %v56, 1
    %v78 = vmul.f32 %v71, %v74
    %v79 = vmul.f32 %v72, %v75
    %80 = vrot.lane.b32.xlu0 %v58, 16
    %v81 = vpop.permute.xlu0 %80
    %82 = vrot.lane.b32.xlu0 %v59, 16
    %v83 = vpop.permute.xlu0 %82
    %vm84 = vcmp.lt.s32.totalorder %v65, 16
    %v85 = vsel %vm84, %v81, %v83
    %v86 = vsel %vm84, %v83, %v81
    %v87 = vsub.f32 %v86, %v58
    %v88 = vsub.f32 %v85, %v59
    %v89 = vand.u32 2147483647, %v87
    %v90 = vand.u32 2147483647, %v88
    %v92 = vperm.slane %v57, 0
    %v93 = vperm.slane %v57, 1
    %v96 = vmul.f32 %v89, %v92
    %v97 = vmul.f32 %v90, %v93
    %v98 = vadd.f32 %v78, %v96
    %v99 = vadd.f32 %v79, %v97
    %v100 = vadd.f32 %v98, %v99
    %101 = vadd.xlane.f32.xlu0 %v100
    %v102 = vpop.xlane.xlu0 %101
    %v103 = vrot.slane %v102, 4
    %v104 = vadd.f32 %v102, %v103
    %v105 = vrot.slane %v104, 2
    %v106 = vadd.f32 %v104, %v105
    %v107 = vrot.slane %v106, 1
    %v108 = vadd.f32 %v106, %v107
    %s109 = vtos %v108
    %s110 = scalar_lea.smem [#allocation8], 0
    %111 = sst [smem:[%s110]] %s109
    // Predicated region
    $region26: #{tpu_custom_call.1} parent=1 // pred_check
      _
    $region27: #{tpu_custom_call.1} parent=1 // pred_check_branch
      %113 = sbr.rel (0) target = $region29
    $region28: #{tpu_custom_call.1} parent=1 // pred_region
      %115 = vsyncadd [#allocation4], 0
      %s117 = sshll.u32 %s3, 4
      %s118 = int_to_ptr.hbm [resolvable:$true] %s117
      %120 = dma.smem_to_hbm [#allocation8], 16, %s118, [#allocation4]
    $region29: #{tpu_custom_call.1} parent=1 // pred_fallthru
      _
    // Predicated region
    $region30: #{tpu_custom_call.1} parent=1 // pred_check
      _
    $region31: #{tpu_custom_call.1} parent=1 // pred_check_branch
      %122 = sbr.rel (0) target = $region33
    $region32: #{tpu_custom_call.1} parent=1 // pred_region
      %124 = dma.done [#allocation4], 16
    $region33: #{tpu_custom_call.1} parent=1 // pred_fallthru
      _
    %125 = sfence
    %126 = vsyncpa [#allocation3], 1
    %127 = vsyncpa [#allocation6], 1
    %128 = vsyncpa [#allocation4], 1

</llo_original>
